<compile_context>
chip_gen: v5e
topology: v5e:2x2
jax: 0.10.0
libtpu: 0.0.40
codegen_flags: <defaults>
</compile_context>

<pallas_src>
import jax
import jax.numpy as jnp
from jax import lax
from jax.experimental import pallas as pl
from jax.experimental.pallas import tpu as pltpu  # noqa: F401  (imported for completeness)

# ---------------- configuration (small shapes consistent with the module) -----
B = 8                      # batch
ACTION_DIM = 4             # voltage, current, temperature, power
STATE_DIM = 8              # battery state features (unused by forward math)
CONSTRAINT_PENALTY = 10.0
SAFETY_BOUNDS = (
    (2.5, 4.2),            # voltage
    (-50.0, 50.0),         # current
    (0.0, 60.0),           # temperature
    (0.0, 100.0),          # power
)


# ---------------- Pallas kernel ------------------------------------------------
def battery_safety_kernel(actions_ref, out_ref):
    a = actions_ref[...]                                   # (B, ACTION_DIM) f32
    col = lax.broadcasted_iota(jnp.int32, a.shape, 1)      # lane index per column

    # Per-column bounds as compile-time constants; columns >= 4 stay unconstrained.
    lo = jnp.full_like(a, -jnp.inf)
    hi = jnp.full_like(a, jnp.inf)
    for c, (l, h) in enumerate(SAFETY_BOUNDS[: min(ACTION_DIM, 4)]):
        lo = jnp.where(col == c, jnp.float32(l), lo)
        hi = jnp.where(col == c, jnp.float32(h), hi)

    clamped = jnp.minimum(jnp.maximum(a, lo), hi)
    violation = jnp.abs(clamped - a)
    penalty = CONSTRAINT_PENALTY * jnp.sum(violation, axis=-1, keepdims=True)  # (B, 1)

    # Lane-packed output slab: [constrained_actions | penalty]
    out_ref[:, :ACTION_DIM] = clamped
    out_ref[:, ACTION_DIM:ACTION_DIM + 1] = penalty


# ---------------- wrapper ------------------------------------------------------
def battery_safety_forward(actions, state=None):
    # `state` is intentionally unused (matches the PyTorch forward, which only
    # uses it for device placement) -> skip the useless DMA entirely.
    del state
    out = pl.pallas_call(
        battery_safety_kernel,
        out_shape=jax.ShapeDtypeStruct((B, ACTION_DIM + 1), jnp.float32),
        in_specs=[pl.BlockSpec((B, ACTION_DIM), lambda: (0, 0))],
        out_specs=pl.BlockSpec((B, ACTION_DIM + 1), lambda: (0, 0)),
    )(actions)
    constrained_actions = out[:, :ACTION_DIM]
    penalty = out[:, ACTION_DIM]
    return constrained_actions, penalty


# ---------------- pure-JAX reference (for correctness check) ------------------
def reference_forward(actions, state=None):
    del state
    cols = []
    penalty = jnp.zeros((actions.shape[0],), jnp.float32)
    for c in range(actions.shape[1]):
        if c < min(ACTION_DIM, 4):
            l, h = SAFETY_BOUNDS[c]
            clamped_c = jnp.clip(actions[:, c], l, h)
            penalty = penalty + CONSTRAINT_PENALTY * jnp.abs(clamped_c - actions[:, c])
        else:
            clamped_c = actions[:, c]
        cols.append(clamped_c)
    constrained = jnp.stack(cols, axis=1)
    return constrained, penalty


# ---------------- main ---------------------------------------------------------
if __name__ == "__main__":
    key = jax.random.PRNGKey(0)
    k_a, k_s = jax.random.split(key)

    # Scale/shift per column so that a good fraction of actions violate the
    # safety bounds (exercises both clamp branches and the penalty path).
    scale = jnp.array([1.5, 80.0, 50.0, 90.0], jnp.float32)
    shift = jnp.array([3.3, 0.0, 30.0, 50.0], jnp.float32)
    actions = jax.random.normal(k_a, (B, ACTION_DIM), jnp.float32) * scale + shift
    state = jax.random.normal(k_s, (B, STATE_DIM), jnp.float32)

    constrained, penalty = battery_safety_forward(actions, state)
    jax.block_until_ready(constrained)
    jax.block_until_ready(penalty)

    ref_c, ref_p = reference_forward(actions, state)
    assert constrained.shape == (B, ACTION_DIM)
    assert penalty.shape == (B,)
    assert jnp.allclose(constrained, ref_c, rtol=1e-5, atol=1e-5)
    assert jnp.allclose(penalty, ref_p, rtol=1e-5, atol=1e-5)

    print("KERNEL_OK")
</pallas_src>

<mosaic_0001>
module attributes {stable_mosaic.version = 11 : i64} {
  func.func @battery_safety_kernel(%arg0: memref<8x4xf32, #tpu.memory_space<vmem>>, %arg1: memref<8x5xf32, #tpu.memory_space<vmem>>) attributes {dimension_semantics = [], scalar_prefetch = 0 : i64, scratch_operands = 0 : i64, tpu.core_type = #tpu.core_type<tc>} {
    %c0 = arith.constant 0 : index
    %c0_0 = arith.constant 0 : index
    %0 = vector.load %arg0[%c0, %c0_0] : memref<8x4xf32, #tpu.memory_space<vmem>>, vector<8x4xf32>
    %1 = tpu.iota {dimensions = array<i32: 1>} : vector<8x4xi32>
    %cst = arith.constant 0xFF800000 : f32
    %2 = vector.broadcast %cst : f32 to vector<8x4xf32>
    %cst_1 = arith.constant 0x7F800000 : f32
    %3 = vector.broadcast %cst_1 : f32 to vector<8x4xf32>
    %c0_i32 = arith.constant 0 : i32
    %4 = vector.broadcast %c0_i32 : i32 to vector<8x4xi32>
    %5 = arith.cmpi eq, %1, %4 : vector<8x4xi32>
    %cst_2 = arith.constant 2.500000e+00 : f32
    %6 = vector.broadcast %cst_2 : f32 to vector<8x4xf32>
    %7 = arith.select %5, %6, %2 : vector<8x4xi1>, vector<8x4xf32>
    %c0_i32_3 = arith.constant 0 : i32
    %8 = vector.broadcast %c0_i32_3 : i32 to vector<8x4xi32>
    %9 = arith.cmpi eq, %1, %8 : vector<8x4xi32>
    %cst_4 = arith.constant 4.200000e+00 : f32
    %10 = vector.broadcast %cst_4 : f32 to vector<8x4xf32>
    %11 = arith.select %9, %10, %3 : vector<8x4xi1>, vector<8x4xf32>
    %c1_i32 = arith.constant 1 : i32
    %12 = vector.broadcast %c1_i32 : i32 to vector<8x4xi32>
    %13 = arith.cmpi eq, %1, %12 : vector<8x4xi32>
    %cst_5 = arith.constant -5.000000e+01 : f32
    %14 = vector.broadcast %cst_5 : f32 to vector<8x4xf32>
    %15 = arith.select %13, %14, %7 : vector<8x4xi1>, vector<8x4xf32>
    %c1_i32_6 = arith.constant 1 : i32
    %16 = vector.broadcast %c1_i32_6 : i32 to vector<8x4xi32>
    %17 = arith.cmpi eq, %1, %16 : vector<8x4xi32>
    %cst_7 = arith.constant 5.000000e+01 : f32
    %18 = vector.broadcast %cst_7 : f32 to vector<8x4xf32>
    %19 = arith.select %17, %18, %11 : vector<8x4xi1>, vector<8x4xf32>
    %c2_i32 = arith.constant 2 : i32
    %20 = vector.broadcast %c2_i32 : i32 to vector<8x4xi32>
    %21 = arith.cmpi eq, %1, %20 : vector<8x4xi32>
    %cst_8 = arith.constant 0.000000e+00 : f32
    %22 = vector.broadcast %cst_8 : f32 to vector<8x4xf32>
    %23 = arith.select %21, %22, %15 : vector<8x4xi1>, vector<8x4xf32>
    %c2_i32_9 = arith.constant 2 : i32
    %24 = vector.broadcast %c2_i32_9 : i32 to vector<8x4xi32>
    %25 = arith.cmpi eq, %1, %24 : vector<8x4xi32>
    %cst_10 = arith.constant 6.000000e+01 : f32
    %26 = vector.broadcast %cst_10 : f32 to vector<8x4xf32>
    %27 = arith.select %25, %26, %19 : vector<8x4xi1>, vector<8x4xf32>
    %c3_i32 = arith.constant 3 : i32
    %28 = vector.broadcast %c3_i32 : i32 to vector<8x4xi32>
    %29 = arith.cmpi eq, %1, %28 : vector<8x4xi32>
    %cst_11 = arith.constant 0.000000e+00 : f32
    %30 = vector.broadcast %cst_11 : f32 to vector<8x4xf32>
    %31 = arith.select %29, %30, %23 : vector<8x4xi1>, vector<8x4xf32>
    %c3_i32_12 = arith.constant 3 : i32
    %32 = vector.broadcast %c3_i32_12 : i32 to vector<8x4xi32>
    %33 = arith.cmpi eq, %1, %32 : vector<8x4xi32>
    %cst_13 = arith.constant 1.000000e+02 : f32
    %34 = vector.broadcast %cst_13 : f32 to vector<8x4xf32>
    %35 = arith.select %33, %34, %27 : vector<8x4xi1>, vector<8x4xf32>
    %36 = arith.maximumf %0, %31 : vector<8x4xf32>
    %37 = arith.minimumf %36, %35 : vector<8x4xf32>
    %38 = arith.subf %37, %0 : vector<8x4xf32>
    %39 = math.absf %38 : vector<8x4xf32>
    %cst_14 = arith.constant dense<0.000000e+00> : vector<8xf32>
    %40 = vector.multi_reduction <add>, %39, %cst_14 [1] : vector<8x4xf32> to vector<8xf32>
    %41 = vector.shape_cast %40 : vector<8xf32> to vector<8x1xf32>
    %cst_15 = arith.constant 1.000000e+01 : f32
    %42 = vector.broadcast %cst_15 : f32 to vector<8x1xf32>
    %43 = arith.mulf %42, %41 : vector<8x1xf32>
    %c0_16 = arith.constant 0 : index
    %c0_17 = arith.constant 0 : index
    %44 = vector.load %arg1[%c0_16, %c0_17] : memref<8x5xf32, #tpu.memory_space<vmem>>, vector<8x4xf32>
    tpu.vector_store %arg1[%c0_16, %c0_17], %37 {strides = array<i32>} : memref<8x5xf32, #tpu.memory_space<vmem>>, vector<8x4xf32>,
    %c0_18 = arith.constant 0 : index
    %c4 = arith.constant 4 : index
    %45 = vector.load %arg1[%c0_18, %c4] : memref<8x5xf32, #tpu.memory_space<vmem>>, vector<8x1xf32>
    tpu.vector_store %arg1[%c0_18, %c4], %43 {strides = array<i32>} : memref<8x5xf32, #tpu.memory_space<vmem>>, vector<8x1xf32>,
    return
  }
}

</mosaic_0001>

<llo_original>
// kernel: tpu_custom_call.1
$region0: #{tpu_custom_call.1}
  #allocation0 [shape = 'u32[]', space=smem, size = 0x4, offset = 0x4, fixed_abs, tag = 'smem constant byte address 0x4 - core index']
  #allocation1 [shape = 'u32[72,128]{1,0:T(1,128)}', space=vmem, size = 0x9000, scoped, tag = 'internal scratch']
  %s0 = inlined_call_operand.vmem [shape: f32[8,4], index: 0, kind: input, shape index: {}]
  %s1 = inlined_call_operand.hbm [shape: f32[8,5], index: 1, kind: output, shape index: {}]
  %s2 = sld [smem:[#allocation0]]
  $region14: #{tpu_custom_call.1} parent=0
    _
  %s4 = ssub.s32 1, %s2
  %s5 = scalar_select 0, %s4, %s2
  $region1: #{tpu_custom_call.1} parent=0
    #allocation2 [shape = 'u8[4096]{0}', space=vmem, size = 0x1000, scoped, tag = 'output window, operand 0, single buffered']
    #allocation3 [shape = 's32[1]{0}', space=sflag, size = 0x4, scoped, tag = 'scoped memory for tpu_custom_call.1']
    %6 = vsyncpa [#allocation3], 0
    // Predicated region
    $region2: #{tpu_custom_call.1} parent=1 // pred_check
      _
    $region3: #{tpu_custom_call.1} parent=1 // pred_check_branch
      %8 = sbr.rel (0) target = $region5
    $region4: #{tpu_custom_call.1} parent=1 // pred_region
      _
    $region5: #{tpu_custom_call.1} parent=1 // pred_fallthru
      _
    %v9 = vld [vmem:[%s0] sm:$0xff]
    %v10 = vlaneseq
    %v11 = vand.u32 %v10, 127
    %vm12 = vcmp.eq.s32.totalorder %v11, 0
    %v13 = vsel %vm12, 2.5, -inf
    %v14 = vsel %vm12, 4.2, inf
    %vm15 = vcmp.eq.s32.totalorder %v11, 1
    %v16 = vsel %vm15, -50.0, %v13
    %v17 = vsel %vm15, 50.0, %v14
    %vm18 = vcmp.eq.s32.totalorder %v11, 2
    %v19 = vsel %vm18, 0.0, %v16
    %v20 = vsel %vm18, 60.0, %v17
    %vm21 = vcmp.eq.s32.totalorder %v11, 3
    %v22 = vsel %vm21, 0.0, %v19
    %v23 = vsel %vm21, 100.0, %v20
    %v24 = vmax.f32 %v9, %v22
    %v25 = vmin.f32 %v24, %v23
    %v26 = vsub.f32 %v25, %v9
    %v27 = vand.u32 2147483647, %v26
    %vm28 = vcmask 31744
    %v29 = vsel %vm28, %v27, 0.0
    %30 = vadd.xlane.f32.xlu0 %v29
    %v31 = vpop.xlane.xlu0 %30
    %v32 = vmul.f32 %v31, 10.0
    %33 = vst.msk [vmem:[#allocation2] sm:$0xff] %vm28, %v25
    %vm34 = vcmask 39968
    %35 = vst.msk [vmem:[#allocation2] sm:$0xff] %vm34, %v32
    // Predicated region
    $region6: #{tpu_custom_call.1} parent=1 // pred_check
      _
    $region7: #{tpu_custom_call.1} parent=1 // pred_check_branch
      %37 = sbr.rel (0) target = $region9
    $region8: #{tpu_custom_call.1} parent=1 // pred_region
      %39 = vsyncadd [#allocation3], 0
      %s41 = sshll.u32 [#allocation2], 4
      %s42 = int_to_ptr.vmem [resolvable:$true] %s41
      %s43 = sshll.u32 %s1, 4
      %s44 = int_to_ptr.hbm [resolvable:$true] %s43
      %46 = dma.vmem_to_hbm [thread:$0]  %s42, 128, %s44, [#allocation3]
    $region9: #{tpu_custom_call.1} parent=1 // pred_fallthru
      _
    // Predicated region
    $region10: #{tpu_custom_call.1} parent=1 // pred_check
      _
    $region11: #{tpu_custom_call.1} parent=1 // pred_check_branch
      %48 = sbr.rel (0) target = $region13
    $region12: #{tpu_custom_call.1} parent=1 // pred_region
      %50 = dma.done [#allocation3], 128
    $region13: #{tpu_custom_call.1} parent=1 // pred_fallthru
      _
    %51 = vsyncpa [#allocation3], 1

</llo_original>
